<compile_context>
chip_gen: v7x
topology: tpu7x:2x2x1
jax: 0.10.0
libtpu: 0.0.40
codegen_flags: <defaults>
</compile_context>

<pallas_src>
import math

import jax
import jax.numpy as jnp
from jax.experimental import pallas as pl
from jax.experimental.pallas import tpu as pltpu


def _mylinear_kernel(x_ref, w_ref, mask_ref, b_ref, o_ref, acc_ref):
    # x_ref   : (tm, tk)  bf16 activation tile
    # w_ref   : (tk, tn)  bf16 weight tile (pre-transposed to (K, N) at prepare time)
    # mask_ref: (1,  tk)  bf16 per-feature bernoulli dropout mask slice
    # b_ref   : (1,  tn)  f32 bias slice
    # o_ref   : (tm, tn)  f32 output tile
    # acc_ref : (tm, tn)  f32 accumulator, persists across the k (reduction) axis
    k = pl.program_id(2)

    @pl.when(k == 0)
    def _():
        acc_ref[...] = jnp.zeros_like(acc_ref)

    # Mask the activation tile (VPU filler hidden under the MXU matmul / weight DMA).
    xm = x_ref[...] * mask_ref[...]
    acc_ref[...] += jnp.dot(xm, w_ref[...], preferred_element_type=jnp.float32)

    @pl.when(k == pl.num_programs(2) - 1)
    def _():
        o_ref[...] = (acc_ref[...] + b_ref[...]).astype(o_ref.dtype)


def _round_up(a, b):
    return ((a + b - 1) // b) * b


def _pick_tile(size_rounded, unit, cap, min_tiles=1):
    """Largest multiple of `unit` that divides `size_rounded` and is <= cap.

    If min_tiles > 1, prefer tiles that leave at least `min_tiles` grid steps
    along this axis (used to keep the j axis shardable across v7x's 2 cores).
    """
    cap = max(unit, min(cap, size_rounded))
    cands = [t for t in range(unit, cap + 1, unit) if size_rounded % t == 0]
    if min_tiles > 1:
        pref = [t for t in cands if size_rounded // t >= min_tiles]
        if pref:
            return max(pref)
    return max(cands)


def prepare_params(weight, bias, compute_dtype=jnp.bfloat16):
    """One-time weight/bias relayout (do this at parameter-init time, not per call).

    weight: (N, K) PyTorch layout, bias: (N,).
    Returns weight transposed to (Kp, Np) in `compute_dtype` (128-padded) and
    bias as a (1, Np) f32 row.
    """
    N, K = weight.shape
    assert bias.shape == (N,)
    Kp, Np = _round_up(K, 128), _round_up(N, 128)
    w_kn = jnp.pad(weight.T.astype(compute_dtype), ((0, Kp - K), (0, Np - N)))
    b_row = jnp.pad(bias.astype(jnp.float32), (0, Np - N)).reshape(1, Np)
    return {"w_kn": w_kn, "bias": b_row, "in_dim": K, "out_dim": N}


def mylinear_forward(x, params, mask, *, tm_cap=512, tn_cap=512, tk_cap=512):
    """x: (B, K) float, params: from prepare_params, mask: (K,). Returns (B, N) f32."""
    w_p = params["w_kn"]
    b_p = params["bias"]
    K = params["in_dim"]
    N = params["out_dim"]

    B, Kx = x.shape
    assert Kx == K and mask.shape == (K,)
    Kp, Np = w_p.shape
    cdtype = w_p.dtype

    # ---- Tile selection: divisors of the rounded dims (no tile-induced padding).
    Bp = _round_up(B, 8)
    tm = _pick_tile(Bp, 8, tm_cap)
    if tm <= 64:
        # Small-batch regime is weight-bandwidth bound: widen the weight tiles.
        tn_cap = max(tn_cap, 512)
        tk_cap = max(tk_cap, 1024)
    # Keep >= 2 j tiles when the i axis can't feed both v7x TensorCores.
    min_j_tiles = 2 if (Bp // tm) < 2 else 1
    tn = _pick_tile(Np, 128, tn_cap, min_tiles=min_j_tiles)
    tk = _pick_tile(Kp, 128, tk_cap)

    grid = (Bp // tm, Np // tn, Kp // tk)

    # ---- Per-call input prep (cheap: only x and mask are touched).
    x_p = jnp.pad(x, ((0, Bp - B), (0, Kp - K))).astype(cdtype)
    mask_p = jnp.pad(mask, (0, Kp - K)).astype(cdtype).reshape(1, Kp)

    # ---- VMEM budget: 2x buffers for x/out, 3x for the weight, + f32 accumulator.
    in_item = jnp.dtype(cdtype).itemsize
    working = (
        2 * tm * tk * in_item        # x (double-buffered)
        + 3 * tk * tn * in_item      # weight (triple-buffered)
        + 2 * tm * tn * 4            # f32 output (double-buffered)
        + tm * tn * 4                # f32 accumulator scratch
        + 2 * (tk * in_item + tn * 4)  # mask + bias rows
    )
    vmem_limit = None
    if working * 3 // 2 > 16 * 2**20:  # may exceed the smallest default scoped VMEM (v5e)
        try:
            phys = pltpu.get_tpu_info().vmem_capacity_bytes
        except Exception:
            phys = 64 * 2**20  # conservative: assume v7x physical VMEM
        cap = min(int(phys * 0.8), 112 * 2**20)
        vmem_limit = min(max(int(working * 2), 32 * 2**20), cap)

    def _build(weight_spec):
        return pl.pallas_call(
            _mylinear_kernel,
            out_shape=jax.ShapeDtypeStruct((Bp, Np), jnp.float32),
            grid_spec=pltpu.PrefetchScalarGridSpec(
                num_scalar_prefetch=0,
                grid=grid,
                in_specs=[
                    pl.BlockSpec((tm, tk), lambda i, j, k: (i, k)),  # x tile
                    weight_spec,                                      # weight (K,N) tile
                    pl.BlockSpec((1, tk), lambda i, j, k: (0, k)),   # dropout mask slice
                    pl.BlockSpec((1, tn), lambda i, j, k: (0, j)),   # bias slice
                ],
                out_specs=pl.BlockSpec((tm, tn), lambda i, j, k: (i, j)),
                scratch_shapes=[pltpu.VMEM((tm, tn), jnp.float32)],
            ),
            compiler_params=pltpu.CompilerParams(
                dimension_semantics=("parallel", "parallel", "arbitrary"),
                vmem_limit_bytes=vmem_limit,
            ),
        )

    try:
        # Deeper pipelining on the weight stream (the binding DMA at small B).
        w_spec = pl.BlockSpec(
            (tk, tn), lambda i, j, k: (k, j), pipeline_mode=pl.Buffered(3)
        )
        out_p = _build(w_spec)(x_p, w_p, mask_p, b_p)
        jax.block_until_ready(out_p)
    except Exception:
        # Fallback: default double-buffering.
        w_spec = pl.BlockSpec((tk, tn), lambda i, j, k: (k, j))
        out_p = _build(w_spec)(x_p, w_p, mask_p, b_p)

    return out_p[:B, :N]


def make_params(key, input_dim, output_dim):
    """Deterministic parameter init matching the PyTorch module's randomize()."""
    kw, kb = jax.random.split(key)
    # xavier_uniform_: U(-b, b), b = sqrt(6 / (fan_in + fan_out))
    bound_w = math.sqrt(6.0 / (input_dim + output_dim))
    weight = jax.random.uniform(
        kw, (output_dim, input_dim), jnp.float32, minval=-bound_w, maxval=bound_w
    )
    # bias: U(-a, a), a = 1/sqrt(input_dim)
    a = 1.0 / math.sqrt(input_dim)
    bias = jax.random.uniform(kb, (output_dim,), jnp.float32, minval=-a, maxval=a)
    return weight, bias


if __name__ == "__main__":
    key = jax.random.PRNGKey(0)
    k_x, k_p, k_drop, k2_x, k2_p, k2_drop = jax.random.split(key, 6)

    keep_prob = 0.5  # module default keep_prob=0.0 would zero every feature; 0.5 is a meaningful demo
    # TODO(synk): torch.bernoulli's device-side RNG is replaced by jax.random.bernoulli
    # generated outside the kernel (same Bernoulli(keep_prob) mask semantics).

    # --- Case 1: tiny module-scale shapes (single-tile grid, correctness demo).
    batch, input_dim, output_dim = 8, 32, 64
    x = jax.random.normal(k_x, (batch, input_dim), jnp.float32)
    weight, bias = make_params(k_p, input_dim, output_dim)
    mask = jax.random.bernoulli(k_drop, p=keep_prob, shape=(input_dim,)).astype(jnp.float32)

    params = prepare_params(weight, bias)  # one-time (Kp, Np) bf16 relayout
    out = mylinear_forward(x, params, mask)
    jax.block_until_ready(out)

    ref_bf16 = ((x * mask).astype(jnp.bfloat16).astype(jnp.float32)
                @ weight.T.astype(jnp.bfloat16).astype(jnp.float32)) + bias
    ref_f32 = (x * mask) @ weight.T + bias
    assert out.shape == (batch, output_dim)
    assert jnp.allclose(out, ref_bf16, atol=2e-3, rtol=2e-3)
    assert jnp.allclose(out, ref_f32, atol=5e-2, rtol=5e-2)

    # --- Case 2: exercises divisor-based tiling (N=384 -> tn=128, 3 j tiles; K=1024 -> tk=1024),
    # the f32 accumulator, and padded-N slicing.
    batch2, input_dim2, output_dim2 = 16, 1024, 384
    x2 = jax.random.normal(k2_x, (batch2, input_dim2), jnp.float32)
    weight2, bias2 = make_params(k2_p, input_dim2, output_dim2)
    mask2 = jax.random.bernoulli(k2_drop, p=keep_prob, shape=(input_dim2,)).astype(jnp.float32)

    params2 = prepare_params(weight2, bias2)
    out2 = mylinear_forward(x2, params2, mask2)
    jax.block_until_ready(out2)

    ref2_bf16 = ((x2 * mask2).astype(jnp.bfloat16).astype(jnp.float32)
                 @ weight2.T.astype(jnp.bfloat16).astype(jnp.float32)) + bias2
    ref2_f32 = (x2 * mask2) @ weight2.T + bias2
    assert out2.shape == (batch2, output_dim2)
    assert jnp.allclose(out2, ref2_bf16, atol=2e-3, rtol=2e-3)
    assert jnp.allclose(out2, ref2_f32, atol=5e-2, rtol=5e-2)

    print("KERNEL_OK")
</pallas_src>

<mosaic_0001>
module attributes {stable_mosaic.version = 11 : i64} {
  func.func @_mylinear_kernel(%arg0: i32, %arg1: i32, %arg2: i32, %arg3: memref<8x128xbf16, #tpu.memory_space<vmem>>, %arg4: memref<128x128xbf16, #tpu.memory_space<vmem>>, %arg5: memref<1x128xbf16, #tpu.memory_space<vmem>>, %arg6: memref<1x128xf32, #tpu.memory_space<vmem>>, %arg7: memref<8x128xf32, #tpu.memory_space<vmem>>, %arg8: memref<8x128xf32, #tpu.memory_space<vmem>>) attributes {dimension_semantics = [#tpu.dimension_semantics<parallel>, #tpu.dimension_semantics<parallel>, #tpu.dimension_semantics<arbitrary>], iteration_bounds = array<i64: 1, 1, 1>, scalar_prefetch = 0 : i64, scratch_operands = 1 : i64, tpu.core_type = #tpu.core_type<tc>, window_params = [{transform_indices = @transform_0, window_bounds = array<i64: 8, 128>}, {transform_indices = @transform_1, window_bounds = array<i64: 128, 128>}, {transform_indices = @transform_2, window_bounds = array<i64: 1, 128>}, {transform_indices = @transform_3, window_bounds = array<i64: 1, 128>}, {transform_indices = @transform_4, window_bounds = array<i64: 8, 128>}]} {
    %c0_i32 = arith.constant 0 : i32
    %0 = arith.cmpi eq, %arg2, %c0_i32 : i32
    %1 = arith.extui %0 : i1 to i32
    %c0_i32_0 = arith.constant 0 : i32
    %2 = arith.cmpi ne, %1, %c0_i32_0 : i32
    scf.if %2 {
      %cst_12 = arith.constant 0.000000e+00 : f32
      %15 = vector.broadcast %cst_12 : f32 to vector<8x128xf32>
      %c0_13 = arith.constant 0 : index
      %c0_14 = arith.constant 0 : index
      %16 = vector.load %arg8[%c0_13, %c0_14] : memref<8x128xf32, #tpu.memory_space<vmem>>, vector<8x128xf32>
      tpu.vector_store %arg8[%c0_13, %c0_14], %15 {strides = array<i32>} : memref<8x128xf32, #tpu.memory_space<vmem>>, vector<8x128xf32>,
    } else {
    }
    %c0 = arith.constant 0 : index
    %c0_1 = arith.constant 0 : index
    %3 = vector.load %arg3[%c0, %c0_1] : memref<8x128xbf16, #tpu.memory_space<vmem>>, vector<8x128xbf16>
    %c0_2 = arith.constant 0 : index
    %c0_3 = arith.constant 0 : index
    %4 = vector.load %arg5[%c0_2, %c0_3] : memref<1x128xbf16, #tpu.memory_space<vmem>>, vector<1x128xbf16>
    %5 = vector.broadcast %4 : vector<1x128xbf16> to vector<8x128xbf16>
    %6 = arith.mulf %3, %5 : vector<8x128xbf16>
    %c0_4 = arith.constant 0 : index
    %c0_5 = arith.constant 0 : index
    %7 = vector.load %arg8[%c0_4, %c0_5] : memref<8x128xf32, #tpu.memory_space<vmem>>, vector<8x128xf32>
    %c0_6 = arith.constant 0 : index
    %c0_7 = arith.constant 0 : index
    %8 = vector.load %arg4[%c0_6, %c0_7] : memref<128x128xbf16, #tpu.memory_space<vmem>>, vector<128x128xbf16>
    %cst = arith.constant dense<0.000000e+00> : vector<8x128xf32>
    %9 = tpu.matmul %6, %8, %cst {dimension_numbers = #tpu.dot_dimension_numbers<[1], [0], [0], [1], [0, 0, 1, 1], [], []>} : vector<8x128xbf16>, vector<128x128xbf16>, vector<8x128xf32> -> vector<8x128xf32>
    %10 = arith.addf %7, %9 : vector<8x128xf32>
    %c0_8 = arith.constant 0 : index
    %c0_9 = arith.constant 0 : index
    %11 = vector.load %arg8[%c0_8, %c0_9] : memref<8x128xf32, #tpu.memory_space<vmem>>, vector<8x128xf32>
    tpu.vector_store %arg8[%c0_8, %c0_9], %10 {strides = array<i32>} : memref<8x128xf32, #tpu.memory_space<vmem>>, vector<8x128xf32>,
    %c0_i32_10 = arith.constant 0 : i32
    %12 = arith.cmpi eq, %arg2, %c0_i32_10 : i32
    %13 = arith.extui %12 : i1 to i32
    %c0_i32_11 = arith.constant 0 : i32
    %14 = arith.cmpi ne, %13, %c0_i32_11 : i32
    scf.if %14 {
      %c0_12 = arith.constant 0 : index
      %c0_13 = arith.constant 0 : index
      %15 = vector.load %arg8[%c0_12, %c0_13] : memref<8x128xf32, #tpu.memory_space<vmem>>, vector<8x128xf32>
      %c0_14 = arith.constant 0 : index
      %c0_15 = arith.constant 0 : index
      %16 = vector.load %arg6[%c0_14, %c0_15] : memref<1x128xf32, #tpu.memory_space<vmem>>, vector<1x128xf32>
      %17 = vector.broadcast %16 : vector<1x128xf32> to vector<8x128xf32>
      %18 = arith.addf %15, %17 : vector<8x128xf32>
      %c0_16 = arith.constant 0 : index
      %c0_17 = arith.constant 0 : index
      %19 = vector.load %arg7[%c0_16, %c0_17] : memref<8x128xf32, #tpu.memory_space<vmem>>, vector<8x128xf32>
      tpu.vector_store %arg7[%c0_16, %c0_17], %18 {strides = array<i32>} : memref<8x128xf32, #tpu.memory_space<vmem>>, vector<8x128xf32>,
    } else {
    }
    return
  }
  func.func @transform_0(%arg0: i32, %arg1: i32, %arg2: i32) -> (i32, i32) {
    %c0_i32 = arith.constant 0 : i32
    return %arg0, %arg2 : i32, i32
  }
  func.func @transform_1(%arg0: i32, %arg1: i32, %arg2: i32) -> (i32, i32) {
    %c0_i32 = arith.constant 0 : i32
    return %arg2, %arg1 : i32, i32
  }
  func.func @transform_2(%arg0: i32, %arg1: i32, %arg2: i32) -> (i32, i32) {
    %c0_i32 = arith.constant 0 : i32
    %c0_i32_0 = arith.constant 0 : i32
    return %c0_i32, %arg2 : i32, i32
  }
  func.func @transform_3(%arg0: i32, %arg1: i32, %arg2: i32) -> (i32, i32) {
    %c0_i32 = arith.constant 0 : i32
    %c0_i32_0 = arith.constant 0 : i32
    return %c0_i32, %arg1 : i32, i32
  }
  func.func @transform_4(%arg0: i32, %arg1: i32, %arg2: i32) -> (i32, i32) {
    %c0_i32 = arith.constant 0 : i32
    return %arg0, %arg1 : i32, i32
  }
}

</mosaic_0001>

<llo_original>
// kernel: tpu_custom_call.1
$region0: #{tpu_custom_call.1}
  #allocation0 [shape = 'u32[]', space=smem, size = 0x4, offset = 0x4, fixed_abs, tag = 'smem constant byte address 0x4 - core index']
  #allocation1 [shape = 'u32[144,128]{1,0:T(1,128)}', space=vmem, size = 0x12000, scoped, tag = 'internal scratch']
  #allocation2 [shape = 'f32[8,128]{1,0:T(8,128)}', space=vmem, size = 0x1000, scoped, tag = 'scratch operand']
  %s0 = inlined_call_operand.hbm [shape: bf16[8,128], index: 0, kind: input, shape index: {}]
  %s1 = inlined_call_operand.hbm [shape: bf16[128,128], index: 1, kind: input, shape index: {}]
  %s2 = inlined_call_operand.vmem [shape: bf16[1,128], index: 2, kind: input, shape index: {}]
  %s3 = inlined_call_operand.vmem [shape: f32[1,128], index: 3, kind: input, shape index: {}]
  %s4 = inlined_call_operand.hbm [shape: f32[8,128], index: 4, kind: output, shape index: {}]
  %s5 = sld [smem:[#allocation0]]
  $region42: #{tpu_custom_call.1} parent=0
    _
  %s7 = ssub.s32 1, %s5
  %s8 = scalar_select 0, %s7, %s5
  $region1: #{tpu_custom_call.1} parent=0
    #allocation3 [shape = 'u8[2048]{0}', space=vmem, size = 0x800, scoped, tag = 'input window, operand 0, single buffered']
    #allocation4 [shape = 's32[1]{0}', space=sflag, size = 0x4, scoped, tag = 'scoped memory for tpu_custom_call.1']
    #allocation5 [shape = 's32[1]{0}', space=sflag, size = 0x4, scoped, tag = 'scoped memory for tpu_custom_call.1']
    #allocation6 [shape = 'u8[32768]{0}', space=vmem, size = 0x8000, scoped, tag = 'input window, operand 1, single buffered']
    #allocation7 [shape = 's32[1]{0}', space=sflag, size = 0x4, scoped, tag = 'scoped memory for tpu_custom_call.1']
    #allocation8 [shape = 'u8[4096]{0}', space=vmem, size = 0x1000, scoped, tag = 'output window, operand 0, single buffered']
    %9 = vsyncpa [#allocation4], 0
    %10 = vsyncpa [#allocation7], 0
    %11 = vsyncpa [#allocation5], 0
    // Predicated region
    $region2: #{tpu_custom_call.1} parent=1 // pred_check
      _
    $region3: #{tpu_custom_call.1} parent=1 // pred_check_branch
      %13 = sbr.rel (0) target = $region5
    $region4: #{tpu_custom_call.1} parent=1 // pred_region
      %s15 = ssub.s32 64, 64
      %16 = vsyncadd [#allocation4], %s15
      %s18 = sshll.u32 [#allocation3], 4
      %s19 = int_to_ptr.vmem [resolvable:$true] %s18
      %21 = dma.hbm_to_vmem [thread:$0]  %s0, 64, %s19, [#allocation4]
    $region5: #{tpu_custom_call.1} parent=1 // pred_fallthru
      _
    // Predicated region
    $region6: #{tpu_custom_call.1} parent=1 // pred_check
      _
    $region7: #{tpu_custom_call.1} parent=1 // pred_check_branch
      %23 = sbr.rel (0) target = $region9
    $region8: #{tpu_custom_call.1} parent=1 // pred_region
      %s25 = ssub.s32 1024, 1024
      %26 = vsyncadd [#allocation7], %s25
      %s27 = sshll.u32 [#allocation6], 4
      %s28 = int_to_ptr.vmem [resolvable:$true] %s27
      %33 = dma.hbm_to_vmem [thread:$0]  %s1, 1024, %s28, [#allocation7], 64, 64, 4
    $region9: #{tpu_custom_call.1} parent=1 // pred_fallthru
      _
    // Predicated region
    $region10: #{tpu_custom_call.1} parent=1 // pred_check
      _
    $region11: #{tpu_custom_call.1} parent=1 // pred_check_branch
      %35 = sbr.rel (0) target = $region13
    $region12: #{tpu_custom_call.1} parent=1 // pred_region
      _
    $region13: #{tpu_custom_call.1} parent=1 // pred_fallthru
      _
    // Predicated region
    $region14: #{tpu_custom_call.1} parent=1 // pred_check
      _
    $region15: #{tpu_custom_call.1} parent=1 // pred_check_branch
      %37 = sbr.rel (0) target = $region17
    $region16: #{tpu_custom_call.1} parent=1 // pred_region
      _
    $region17: #{tpu_custom_call.1} parent=1 // pred_fallthru
      _
    // Predicated region
    $region18: #{tpu_custom_call.1} parent=1 // pred_check
      _
    $region19: #{tpu_custom_call.1} parent=1 // pred_check_branch
      %39 = sbr.rel (0) target = $region21
    $region20: #{tpu_custom_call.1} parent=1 // pred_region
      %40 = dma.done [#allocation4], 64
    $region21: #{tpu_custom_call.1} parent=1 // pred_fallthru
      _
    // Predicated region
    $region22: #{tpu_custom_call.1} parent=1 // pred_check
      _
    $region23: #{tpu_custom_call.1} parent=1 // pred_check_branch
      %42 = sbr.rel (0) target = $region25
    $region24: #{tpu_custom_call.1} parent=1 // pred_region
      %43 = dma.done [#allocation7], 1024
    $region25: #{tpu_custom_call.1} parent=1 // pred_fallthru
      _
    %p45 = scmp.eq.s32.totalorder 0, 0
    // Predicated region
    $region26: #{tpu_custom_call.1} parent=1 // pred_check
      %p46 = pneg %p45
    $region27: #{tpu_custom_call.1} parent=1 // pred_check_branch
      %48 = sbr.rel (%p46) target = $region29
    $region28: #{tpu_custom_call.1} parent=1 // pred_region
      %49 = vst [vmem:[#allocation2] sm:$0xff] 0.0
    $region29: #{tpu_custom_call.1} parent=1 // pred_fallthru
      _
    %v50 = vld [vmem:[#allocation3] sm:$0xf]
    %v51 = vld [vmem:[%s2] sm:$0x1]
    %v53 = vpack.i.b16 %v51, %v51
    %v55 = vlaneseq
    %v56 = vshrl.u32 %v55, 7
    %v57 = vsub.s32 0, %v56
    %v58 = vrot.slane %v53, %v57
    %v59 = vmul.bf16 %v50, %v58
    %v60 = vld [vmem:[#allocation2] sm:$0xff]
    %v61 = vld [vmem:[#allocation6] sm:$0xf]
    %v62 = vld [vmem:[#allocation6 + $0x4] sm:$0xf]
    %v63 = vld [vmem:[#allocation6 + $0x8] sm:$0xf]
    %v64 = vld [vmem:[#allocation6 + $0xc] sm:$0xf]
    %v65 = vld [vmem:[#allocation6 + $0x10] sm:$0xf]
    %v66 = vld [vmem:[#allocation6 + $0x14] sm:$0xf]
    %v67 = vld [vmem:[#allocation6 + $0x18] sm:$0xf]
    %v68 = vld [vmem:[#allocation6 + $0x1c] sm:$0xf]
    %v69 = vld [vmem:[#allocation6 + $0x20] sm:$0xf]
    %v70 = vld [vmem:[#allocation6 + $0x24] sm:$0xf]
    %v71 = vld [vmem:[#allocation6 + $0x28] sm:$0xf]
    %v72 = vld [vmem:[#allocation6 + $0x2c] sm:$0xf]
    %v73 = vld [vmem:[#allocation6 + $0x30] sm:$0xf]
    %v74 = vld [vmem:[#allocation6 + $0x34] sm:$0xf]
    %v75 = vld [vmem:[#allocation6 + $0x38] sm:$0xf]
    %v76 = vld [vmem:[#allocation6 + $0x3c] sm:$0xf]
    %v93 = vunpack.c.l.b16 %v61
    %v94 = vunpack.c.l.b16 %v62
    %v95 = vunpack.c.l.b16 %v63
    %v96 = vunpack.c.l.b16 %v64
    %v97 = vunpack.c.l.b16 %v65
    %v98 = vunpack.c.l.b16 %v66
    %v99 = vunpack.c.l.b16 %v67
    %v100 = vunpack.c.l.b16 %v68
    %v101 = vunpack.c.l.b16 %v69
    %v102 = vunpack.c.l.b16 %v70
    %v103 = vunpack.c.l.b16 %v71
    %v104 = vunpack.c.l.b16 %v72
    %v105 = vunpack.c.l.b16 %v73
    %v106 = vunpack.c.l.b16 %v74
    %v107 = vunpack.c.l.b16 %v75
    %v108 = vunpack.c.l.b16 %v76
    %v109 = vpack.c.b16 %v94, %v93
    %v110 = vpack.c.b16 %v96, %v95
    %v111 = vpack.c.b16 %v98, %v97
    %v112 = vpack.c.b16 %v100, %v99
    %v113 = vpack.c.b16 %v102, %v101
    %v114 = vpack.c.b16 %v104, %v103
    %v115 = vpack.c.b16 %v106, %v105
    %v116 = vpack.c.b16 %v108, %v107
    %125 = vmatprep.subr.bf16.mxu0 0
    %126 = vmatpush1.bf16.msra.mxu0 %v109
    %127 = vmatprep.subr.bf16.mxu0 0
    %128 = vmatpush1.bf16.msra.mxu0 %v110
    %129 = vmatprep.subr.bf16.mxu0 0
    %130 = vmatpush1.bf16.msra.mxu0 %v111
    %131 = vmatprep.subr.bf16.mxu0 0
    %132 = vmatpush1.bf16.msra.mxu0 %v112
    %133 = vmatprep.subr.bf16.mxu0 0
    %134 = vmatpush1.bf16.msra.mxu0 %v113
    %135 = vmatprep.subr.bf16.mxu0 0
    %136 = vmatpush1.bf16.msra.mxu0 %v114
    %137 = vmatprep.subr.bf16.mxu0 0
    %138 = vmatpush1.bf16.msra.mxu0 %v115
    %139 = vmatprep.subr.bf16.mxu0 0
    %140 = vmatpush1.bf16.msra.mxu0 %v116
    %141 = vmatprep.subr.bf16.mxu0 0
    %142 = vmatpush1.bf16.msra.mxu0 0
    %143 = vmatprep.subr.bf16.mxu0 0
    %144 = vmatpush1.bf16.msra.mxu0 0
    %145 = vmatprep.subr.bf16.mxu0 0
    %146 = vmatpush1.bf16.msra.mxu0 0
    %147 = vmatprep.subr.bf16.mxu0 0
    %148 = vmatpush1.bf16.msra.mxu0 0
    %149 = vmatprep.subr.bf16.mxu0 0
    %150 = vmatpush1.bf16.msra.mxu0 0
    %151 = vmatprep.subr.bf16.mxu0 0
    %152 = vmatpush1.bf16.msra.mxu0 0
    %153 = vmatprep.subr.bf16.mxu0 0
    %154 = vmatpush1.bf16.msra.mxu0 0
    %155 = vmatprep.subr.bf16.mxu0 0
    %156 = vmatpush1.bf16.msra.mxu0 0
    %157 = vmatprep.mubr.bf16.mxu0 0
    %158 = vmatmul.mubr.bf16.gmra.mrb[0].mxu0 %v59
    %v159 = vpop.f32.mrb[0].mxu0
    %v160 = vadd.f32 0.0, %v159
    %v161 = vpop.f32.mrb[0].mxu0
    %v162 = vpop.f32.mrb[0].mxu0
    %v163 = vpop.f32.mrb[0].mxu0
    %164 = vdwg.mxu0
    %v165 = vadd.f32 %v60, %v160
    %166 = vst [vmem:[#allocation2] sm:$0xff] %v165
    // Predicated region
    $region30: #{tpu_custom_call.1} parent=1 // pred_check
      %p167 = pneg %p45
    $region31: #{tpu_custom_call.1} parent=1 // pred_check_branch
      %169 = sbr.rel (%p167) target = $region33
    $region32: #{tpu_custom_call.1} parent=1 // pred_region
      %v170 = vld [vmem:[#allocation2] sm:$0xff]
      %v171 = vld [vmem:[%s3] sm:$0x1]
      %v173 = vlaneseq
      %v174 = vshrl.u32 %v173, 7
      %v175 = vsub.s32 0, %v174
      %v176 = vrot.slane %v171, %v175
      %v178 = vadd.f32 %v170, %v176
      %179 = vst [vmem:[#allocation8] sm:$0xff] %v178
    $region33: #{tpu_custom_call.1} parent=1 // pred_fallthru
      _
    // Predicated region
    $region34: #{tpu_custom_call.1} parent=1 // pred_check
      _
    $region35: #{tpu_custom_call.1} parent=1 // pred_check_branch
      %181 = sbr.rel (0) target = $region37
    $region36: #{tpu_custom_call.1} parent=1 // pred_region
      %s183 = ssub.s32 128, 128
      %184 = vsyncadd [#allocation5], %s183
      %s186 = sshll.u32 [#allocation8], 4
      %s187 = int_to_ptr.vmem [resolvable:$true] %s186
      %189 = dma.vmem_to_hbm [thread:$0]  %s187, 128, %s4, [#allocation5]
    $region37: #{tpu_custom_call.1} parent=1 // pred_fallthru
      _
    // Predicated region
    $region38: #{tpu_custom_call.1} parent=1 // pred_check
      _
    $region39: #{tpu_custom_call.1} parent=1 // pred_check_branch
      %191 = sbr.rel (0) target = $region41
    $region40: #{tpu_custom_call.1} parent=1 // pred_region
      %192 = dma.done [#allocation5], 128
    $region41: #{tpu_custom_call.1} parent=1 // pred_fallthru
      _
    %193 = vsyncpa [#allocation4], 1
    %194 = vsyncpa [#allocation7], 1
    %195 = vsyncpa [#allocation5], 1

</llo_original>
